<compile_context>
chip_gen: v7x
topology: tpu7x:2x2x1
jax: 0.10.0
libtpu: 0.0.40
codegen_flags: <defaults>
</compile_context>

<pallas_src>
import functools

import jax
import jax.numpy as jnp
from jax.experimental import pallas as pl
from jax.experimental.pallas import tpu as pltpu


def _latent_code_kernel(x_ref, codes_ref, out_ref, *,
                        num_features: int, latent_code_dim: int,
                        num_latent_codes: int, max_time: float):
    """Fused per-tile kernel: (TB, D) rows -> (TB, D-1+L) [features | latents]."""
    x = x_ref[...]                                     # (TB, D) f32 row block
    codes = codes_ref[...]                             # (N, Lp) f32, resident
    tb = x.shape[0]

    # --- interpolation index math on the time column (all (TB, 1) vectors).
    #     Keep the exact reference expression ((N-1)*t/max_time) so floor/ceil
    #     agree bit-for-bit with the pure-JAX reference at boundary times. ---
    t = x[:, num_features:num_features + 1]            # (TB, 1)
    t_clipped = jnp.clip(t, 0.0, max_time)
    index = (num_latent_codes - 1) * t_clipped / max_time
    idx_floor_f = jnp.clip(jnp.floor(index), 0.0, num_latent_codes - 1)
    idx_ceil_f = jnp.clip(jnp.ceil(index), 0.0, num_latent_codes - 1)
    frac = index - idx_floor_f
    idx_floor_i = idx_floor_f.astype(jnp.int32)
    idx_ceil_i = idx_ceil_f.astype(jnp.int32)

    # --- gather weights: one reused iota, 2x where + add (fewer VALU passes
    #     over the lane-padded (TB, N) tile).  Reproduces the reference quirk:
    #     the "ceil" code is weighted by the integer floor index. ---
    iota = jax.lax.broadcasted_iota(jnp.int32, (tb, num_latent_codes), 1)
    w = (jnp.where(iota == idx_floor_i, 1.0 - frac, 0.0)
         + jnp.where(iota == idx_ceil_i, idx_floor_f, 0.0))        # (TB, N)

    # --- single MXU gather+blend: (TB, N) @ (N, Lp) -> (TB, Lp) ---
    sampled = jnp.dot(w, codes, preferred_element_type=jnp.float32)
    if codes.shape[1] != latent_code_dim:               # drop lane padding, if any
        sampled = sampled[:, :latent_code_dim]

    # --- fused passthrough + concat, one full-tile store.  Features stay on
    #     the VPU path (bit-exact); only the latent chunk pays a small lane
    #     shift (module semantics fix the [features | latents] order). ---
    if num_features > 0:
        out = jnp.concatenate([x[:, :num_features], sampled], axis=1)
    else:
        out = sampled
    out_ref[...] = out.astype(out_ref.dtype)


def _interpolate_latent_code_jax(t, latent_codes, *, max_time: float):
    """Pure-JAX interpolation (small-batch fallback / reference), same quirk."""
    num_latent_codes = latent_codes.shape[0]
    t_clipped = jnp.clip(t, 0.0, max_time)
    index = (num_latent_codes - 1) * t_clipped / max_time
    idx_floor = jnp.clip(jnp.floor(index), 0, num_latent_codes - 1).astype(jnp.int32)
    idx_ceil = jnp.clip(jnp.ceil(index), 0, num_latent_codes - 1).astype(jnp.int32)
    frac = index - idx_floor
    code_floor = latent_codes[idx_floor]
    code_ceil = latent_codes[idx_ceil]
    return ((1.0 - frac)[:, None] * code_floor
            + idx_floor.astype(latent_codes.dtype)[:, None] * code_ceil)


def _round8_down(n: int) -> int:
    return max(8, (n // 8) * 8)


def _choose_block_b(B: int, block_b: int) -> int:
    """Pick the batch tile.

    Tiles are sublane-aligned (multiple of 8) and at most `block_b` rows.
    For batches that would otherwise give a short grid we shrink the tile so
    there are >= 4 grid steps (pipeline double-buffering + v7x's two
    TensorCores sharding the "parallel" axis), but never below 512 rows.
    B does NOT have to divide by the tile: the last partial tile is handled by
    Pallas's out-of-bounds write masking (padded rows compute garbage that is
    dropped on writeback).
    """
    tb = _round8_down(min(block_b, B))
    if pl.cdiv(B, tb) < 4:
        target = max(512, _round8_down(pl.cdiv(B, 4)))
        if target < tb:
            tb = target
    return tb


def latent_code_layer_forward(x, latent_codes, *, max_time: float,
                              block_b: int = 2048, min_pallas_batch: int = 256,
                              out_dtype=None):
    """x: (B, D) with last entry the time.  latent_codes: (N, L)."""
    num_latent_codes, latent_code_dim = latent_codes.shape
    max_time = max(float(max_time), 0.01)
    B, D = x.shape
    num_features = D - 1
    out_dtype = x.dtype if out_dtype is None else out_dtype
    # TODO(synk): out_dtype=jnp.bfloat16 halves HBM writes (op is write-bound)
    # but will not meet 1e-5 tolerances; math stays f32 either way.

    if num_latent_codes == 0:
        return x[:, :num_features].astype(out_dtype)

    if B < min_pallas_batch:
        # Tiny batch: kernel launch + per-step overhead would dominate.
        sampled = _interpolate_latent_code_jax(
            x[:, num_features], latent_codes.astype(jnp.float32), max_time=max_time)
        return jnp.concatenate([x[:, :num_features], sampled], axis=1).astype(out_dtype)

    # Lane-pad the (tiny, resident) latent-code table to a multiple of 128 so
    # the MXU result tile is lane-dense for any L; the kernel drops the pad.
    lanes = ((latent_code_dim + 127) // 128) * 128
    codes = latent_codes.astype(jnp.float32)
    if lanes != latent_code_dim:
        codes = jnp.pad(codes, ((0, 0), (0, lanes - latent_code_dim)))

    tb = _choose_block_b(B, block_b)
    out_cols = num_features + latent_code_dim

    # Per-step VMEM (rough, lane-padded f32): 2-buffered x block + 2-buffered
    # output block + a handful of (tb, 128) intermediates.  Set the scoped
    # VMEM limit explicitly (defaults 16/32/32 MiB on v5e/v6e/v7x) so large
    # tiles are not silently rejected; cap at 64 MiB for v7x's smaller VMEM.
    out_lanes = ((out_cols + 127) // 128) * 128
    est_step_bytes = 4 * tb * (2 * 128 + 2 * out_lanes + 6 * 128)
    vmem_limit = int(min(64 * 1024 * 1024,
                         max(32 * 1024 * 1024, 2 * est_step_bytes)))

    kernel = functools.partial(
        _latent_code_kernel,
        num_features=num_features,
        latent_code_dim=latent_code_dim,
        num_latent_codes=num_latent_codes,
        max_time=max_time,
    )

    return pl.pallas_call(
        kernel,
        out_shape=jax.ShapeDtypeStruct((B, out_cols), out_dtype),
        grid_spec=pltpu.PrefetchScalarGridSpec(
            num_scalar_prefetch=0,
            grid=(pl.cdiv(B, tb),),
            in_specs=[
                pl.BlockSpec((tb, D), lambda i: (i, 0)),                 # x rows
                pl.BlockSpec((num_latent_codes, lanes), lambda i: (0, 0)),  # resident codes
            ],
            out_specs=pl.BlockSpec((tb, out_cols), lambda i: (i, 0)),
        ),
        compiler_params=pltpu.CompilerParams(
            dimension_semantics=("parallel",),
            vmem_limit_bytes=vmem_limit),
    )(x.astype(jnp.float32), codes)


def _reference_forward(x, latent_codes, *, max_time: float):
    """Pure-JAX replica of the PyTorch forward (including its quirks)."""
    num_latent_codes = latent_codes.shape[0]
    max_time = max(max_time, 0.01)
    if num_latent_codes == 0:
        return x[:, :-1]
    sampled = _interpolate_latent_code_jax(x[:, -1], latent_codes, max_time=max_time)
    return jnp.concatenate([x[:, :-1], sampled], axis=1)


if __name__ == "__main__":
    # Deterministic setup.  B=512 with block_b=128 exercises a 4-step grid;
    # B=456 exercises a partial last tile; B=8 exercises the small-batch
    # fallback.
    num_latent_codes = 10
    max_time = 10.0
    latent_code_dim = 128        # lane-dense latent chunk (multiple of 128)
    B, D = 512, 9                # 8 feature dims + 1 time entry

    key = jax.random.PRNGKey(0)
    k_codes, k_feat, k_time = jax.random.split(key, 3)

    # Parameter init: normal(0, 0.01 / sqrt(latent_code_dim)), like the module.
    latent_codes = (0.01 / jnp.sqrt(jnp.float32(max(latent_code_dim, 1)))
                    * jax.random.normal(k_codes, (num_latent_codes, latent_code_dim),
                                        dtype=jnp.float32))

    feats = jax.random.normal(k_feat, (B, D - 1), dtype=jnp.float32)
    times = jax.random.uniform(k_time, (B, 1), dtype=jnp.float32,
                               minval=-1.0, maxval=max_time + 2.0)
    x = jnp.concatenate([feats, times], axis=1)   # (B, D)

    ref = _reference_forward(x, latent_codes, max_time=max_time)

    # --- fused Pallas path, 4-step grid (tb=128) ---
    out = jax.block_until_ready(
        latent_code_layer_forward(x, latent_codes, max_time=max_time, block_b=128))
    assert out.shape == (B, D - 1 + latent_code_dim)
    assert jnp.allclose(out, ref, atol=1e-5, rtol=1e-5), "pallas path mismatch"

    # --- partial last tile (B % tb != 0): OOB output rows masked on writeback ---
    xp = x[:456]
    outp = jax.block_until_ready(
        latent_code_layer_forward(xp, latent_codes, max_time=max_time, block_b=128))
    refp = _reference_forward(xp, latent_codes, max_time=max_time)
    assert jnp.allclose(outp, refp, atol=1e-5, rtol=1e-5), "partial-tile mismatch"

    # --- small-batch fallback path ---
    outs = jax.block_until_ready(
        latent_code_layer_forward(x[:8], latent_codes, max_time=max_time))
    refs = _reference_forward(x[:8], latent_codes, max_time=max_time)
    assert jnp.allclose(outs, refs, atol=1e-5, rtol=1e-5), "fallback mismatch"

    print("KERNEL_OK")
</pallas_src>

<mosaic_0001>
module attributes {stable_mosaic.version = 11 : i64} {
  func.func @_latent_code_kernel(%arg0: i32, %arg1: memref<128x9xf32, #tpu.memory_space<vmem>>, %arg2: memref<10x128xf32, #tpu.memory_space<vmem>>, %arg3: memref<128x136xf32, #tpu.memory_space<vmem>>) attributes {dimension_semantics = [#tpu.dimension_semantics<parallel>], iteration_bounds = array<i64: 4>, scalar_prefetch = 0 : i64, scratch_operands = 0 : i64, tpu.core_type = #tpu.core_type<tc>, window_params = [{transform_indices = @transform_0, window_bounds = array<i64: 128, 9>}, {pipeline_mode = #tpu.pipeline_mode<synchronous>, transform_indices = @transform_1, window_bounds = array<i64: 10, 128>}, {transform_indices = @transform_2, window_bounds = array<i64: 128, 136>}]} {
    %c0 = arith.constant 0 : index
    %c0_0 = arith.constant 0 : index
    %0 = vector.load %arg1[%c0, %c0_0] : memref<128x9xf32, #tpu.memory_space<vmem>>, vector<128x9xf32>
    %c0_1 = arith.constant 0 : index
    %c0_2 = arith.constant 0 : index
    %1 = vector.load %arg2[%c0_1, %c0_2] : memref<10x128xf32, #tpu.memory_space<vmem>>, vector<10x128xf32>
    %2 = vector.extract_strided_slice %0 {offsets = [0, 8], sizes = [128, 1], strides = [1, 1]} : vector<128x9xf32> to vector<128x1xf32>
    %cst = arith.constant 0.000000e+00 : f32
    %cst_3 = arith.constant 1.000000e+01 : f32
    %3 = vector.broadcast %cst : f32 to vector<128x1xf32>
    %4 = arith.maximumf %3, %2 : vector<128x1xf32>
    %5 = vector.broadcast %cst_3 : f32 to vector<128x1xf32>
    %6 = arith.minimumf %5, %4 : vector<128x1xf32>
    %cst_4 = arith.constant 9.000000e+00 : f32
    %7 = vector.broadcast %cst_4 : f32 to vector<128x1xf32>
    %8 = arith.mulf %7, %6 : vector<128x1xf32>
    %cst_5 = arith.constant 1.000000e+01 : f32
    %9 = vector.broadcast %cst_5 : f32 to vector<128x1xf32>
    %10 = arith.divf %8, %9 : vector<128x1xf32>
    %11 = math.floor %10 : vector<128x1xf32>
    %cst_6 = arith.constant 0.000000e+00 : f32
    %c9_i32 = arith.constant 9 : i32
    %12 = vector.broadcast %cst_6 : f32 to vector<128x1xf32>
    %13 = arith.maximumf %12, %11 : vector<128x1xf32>
    %14 = arith.sitofp %c9_i32 : i32 to f32
    %15 = vector.broadcast %14 : f32 to vector<128x1xf32>
    %16 = arith.minimumf %15, %13 : vector<128x1xf32>
    %17 = math.ceil %10 : vector<128x1xf32>
    %cst_7 = arith.constant 0.000000e+00 : f32
    %c9_i32_8 = arith.constant 9 : i32
    %18 = vector.broadcast %cst_7 : f32 to vector<128x1xf32>
    %19 = arith.maximumf %18, %17 : vector<128x1xf32>
    %20 = arith.sitofp %c9_i32_8 : i32 to f32
    %21 = vector.broadcast %20 : f32 to vector<128x1xf32>
    %22 = arith.minimumf %21, %19 : vector<128x1xf32>
    %23 = arith.subf %10, %16 : vector<128x1xf32>
    %24 = arith.fptosi %16 : vector<128x1xf32> to vector<128x1xi32>
    %25 = arith.fptosi %22 : vector<128x1xf32> to vector<128x1xi32>
    %26 = tpu.iota {dimensions = array<i32: 1>} : vector<128x10xi32>
    %27 = vector.broadcast %24 : vector<128x1xi32> to vector<128x10xi32>
    %28 = arith.cmpi eq, %26, %27 : vector<128x10xi32>
    %cst_9 = arith.constant 1.000000e+00 : f32
    %29 = vector.broadcast %cst_9 : f32 to vector<128x1xf32>
    %30 = arith.subf %29, %23 : vector<128x1xf32>
    %cst_10 = arith.constant 0.000000e+00 : f32
    %31 = vector.shape_cast %30 : vector<128x1xf32> to vector<128x1xf32>
    %32 = vector.broadcast %31 : vector<128x1xf32> to vector<128x10xf32>
    %33 = vector.broadcast %cst_10 : f32 to vector<128x10xf32>
    %34 = arith.select %28, %32, %33 : vector<128x10xi1>, vector<128x10xf32>
    %35 = vector.broadcast %25 : vector<128x1xi32> to vector<128x10xi32>
    %36 = arith.cmpi eq, %26, %35 : vector<128x10xi32>
    %cst_11 = arith.constant 0.000000e+00 : f32
    %37 = vector.shape_cast %16 : vector<128x1xf32> to vector<128x1xf32>
    %38 = vector.broadcast %37 : vector<128x1xf32> to vector<128x10xf32>
    %39 = vector.broadcast %cst_11 : f32 to vector<128x10xf32>
    %40 = arith.select %36, %38, %39 : vector<128x10xi1>, vector<128x10xf32>
    %41 = arith.addf %34, %40 : vector<128x10xf32>
    %cst_12 = arith.constant dense<0.000000e+00> : vector<128x128xf32>
    %42 = tpu.matmul %41, %1, %cst_12 {dimension_numbers = #tpu.dot_dimension_numbers<[1], [0], [0], [1], [0, 0, 1, 1], [], []>} : vector<128x10xf32>, vector<10x128xf32>, vector<128x128xf32> -> vector<128x128xf32>
    %43 = vector.extract_strided_slice %0 {offsets = [0, 0], sizes = [128, 8], strides = [1, 1]} : vector<128x9xf32> to vector<128x8xf32>
    %44 = tpu.concatenate %43, %42 in 1 : vector<128x8xf32>, vector<128x128xf32> -> vector<128x136xf32>
    %c0_13 = arith.constant 0 : index
    %c0_14 = arith.constant 0 : index
    %45 = vector.load %arg3[%c0_13, %c0_14] : memref<128x136xf32, #tpu.memory_space<vmem>>, vector<128x136xf32>
    tpu.vector_store %arg3[%c0_13, %c0_14], %44 {strides = array<i32>} : memref<128x136xf32, #tpu.memory_space<vmem>>, vector<128x136xf32>,
    return
  }
  func.func @transform_0(%arg0: i32) -> (i32, i32) {
    %c0_i32 = arith.constant 0 : i32
    %c0_i32_0 = arith.constant 0 : i32
    return %arg0, %c0_i32 : i32, i32
  }
  func.func @transform_1(%arg0: i32) -> (i32, i32) {
    %c0_i32 = arith.constant 0 : i32
    %c0_i32_0 = arith.constant 0 : i32
    %c0_i32_1 = arith.constant 0 : i32
    return %c0_i32, %c0_i32_0 : i32, i32
  }
  func.func @transform_2(%arg0: i32) -> (i32, i32) {
    %c0_i32 = arith.constant 0 : i32
    %c0_i32_0 = arith.constant 0 : i32
    return %arg0, %c0_i32 : i32, i32
  }
}

</mosaic_0001>

<llo_original>
// kernel: tpu_custom_call.1
$region0: #{tpu_custom_call.1}
  #allocation0 [shape = 'u32[]', space=smem, size = 0x4, offset = 0x4, fixed_abs, tag = 'smem constant byte address 0x4 - core index']
  #allocation1 [shape = 'u32[144,128]{1,0:T(1,128)}', space=vmem, size = 0x12000, scoped, tag = 'internal scratch']
  %s0 = inlined_call_operand.vmem [shape: f32[512,9], index: 0, kind: input, shape index: {}]
  %s1 = inlined_call_operand.vmem [shape: f32[10,128], index: 1, kind: input, shape index: {}]
  %s2 = inlined_call_operand.vmem [shape: f32[512,136], index: 2, kind: output, shape index: {}]
  %s3 = sld [smem:[#allocation0]]
  $region41: #{tpu_custom_call.1} parent=0
    _
  %s5 = ssub.s32 1, %s3
  %s6 = scalar_select 0, %s5, %s3
  loop: start=0, step=1, limit=6
  $region2: #{tpu_custom_call.1} parent=0 // loop_pre_header
    _
  $region3: #{tpu_custom_call.1} parent=0 // loop_header
    %s8 = sphi 0, %s12
    %p9 = scmp.ge.s32.totalorder %s8, 6
    %s18 = sphi 0, %s20
    %s21 = sphi 0, %s18
    %s22 = sphi 0, %s21
    %s38 = sphi 0, %s22
    %s42 = sphi 0, %s42
    %s44 = sphi 0, %s42
    %s45 = sphi 0, %s44
    %s59 = sphi 0, %s45
    %s65 = sphi 0, %s67
    %s68 = sphi 0, %s65
    %s69 = sphi 0, %s68
    %s85 = sphi 0, %s69
  $region4: #{tpu_custom_call.1} parent=0 // loop_header_branch
    %11 = sbr.rel (%p9) target = $region8
  $region5: #{tpu_custom_call.1} parent=0 // loop_body
    %s13 = ssub.s32 %s8, 1
    %s14 = ssub.s32 %s8, 2
    %s15 = sadd.s32 %s8, 1
    %s16 = ssub.s32 %s8, %s15
    %p17 = scmp.eq.s32.totalorder %s16, 0
    %s19 = sadd.s32 %s18, 1
    %s20 = scalar_select %p17, %s18, %s19
    %p23 = pneg %p17
    %p24 = scmp.eq.s32.totalorder %s8, 3
    %p25 = por %p23, %p24
    %p26 = scmp.ne.s32.totalorder %s18, %s21
    %p27 = scmp.eq.s32.totalorder %s8, 0
    %p28 = por %p26, %p27
    %p29 = scmp.ne.s32.totalorder %s18, %s21
    %p30 = scmp.eq.s32.totalorder %s13, 3
    %p31 = por %p29, %p30
    %p32 = scmp.ne.s32.totalorder %s21, %s22
    %p33 = scmp.eq.s32.totalorder %s13, 0
    %p34 = por %p32, %p33
    %p35 = scmp.ne.s32.totalorder %s21, %s22
    %p36 = scmp.eq.s32.totalorder %s14, 3
    %p37 = por %p35, %p36
    %p39 = scmp.ne.s32.totalorder %s22, %s38
    %p40 = scmp.eq.s32.totalorder %s14, 0
    %p41 = por %p39, %p40
    %s43 = sadd.s32 %s42, 1
    %p46 = scmp.eq.s32.totalorder %s8, 3
    %p47 = scmp.ne.s32.totalorder %s42, %s44
    %p48 = scmp.eq.s32.totalorder %s8, 0
    %p49 = por %p47, %p48
    %p50 = scmp.ne.s32.totalorder %s42, %s44
    %p51 = scmp.eq.s32.totalorder %s13, 3
    %p52 = por %p50, %p51
    %p53 = scmp.ne.s32.totalorder %s44, %s45
    %p54 = scmp.eq.s32.totalorder %s13, 0
    %p55 = por %p53, %p54
    %p56 = scmp.ne.s32.totalorder %s44, %s45
    %p57 = scmp.eq.s32.totalorder %s14, 3
    %p58 = por %p56, %p57
    %p60 = scmp.ne.s32.totalorder %s45, %s59
    %p61 = scmp.eq.s32.totalorder %s14, 0
    %p62 = por %p60, %p61
    %s63 = ssub.s32 %s8, %s15
    %p64 = scmp.eq.s32.totalorder %s63, 0
    %s66 = sadd.s32 %s65, 1
    %s67 = scalar_select %p64, %s65, %s66
    %p70 = pneg %p64
    %p71 = scmp.eq.s32.totalorder %s8, 3
    %p72 = por %p70, %p71
    %p73 = scmp.ne.s32.totalorder %s65, %s68
    %p74 = scmp.eq.s32.totalorder %s8, 0
    %p75 = por %p73, %p74
    %p76 = scmp.ne.s32.totalorder %s65, %s68
    %p77 = scmp.eq.s32.totalorder %s13, 3
    %p78 = por %p76, %p77
    %p79 = scmp.ne.s32.totalorder %s68, %s69
    %p80 = scmp.eq.s32.totalorder %s13, 0
    %p81 = por %p79, %p80
    %p82 = scmp.ne.s32.totalorder %s68, %s69
    %p83 = scmp.eq.s32.totalorder %s14, 3
    %p84 = por %p82, %p83
    %p86 = scmp.ne.s32.totalorder %s69, %s85
    %p87 = scmp.eq.s32.totalorder %s14, 0
    %p88 = por %p86, %p87
    %p89 = scmp.le.s32.totalorder 1, %s8
    %p90 = scmp.lt.s32.totalorder %s8, 5
    %p91 = pnand %p89, %p90
    %p92 = pneg %p91
    // Predicated region
    $region9: #{tpu_custom_call.1} parent=5 // pred_check
      _
    $region10: #{tpu_custom_call.1} parent=5 // pred_check_branch
      %94 = sbr.rel (%p91) target = $region12
    $region11: #{tpu_custom_call.1} parent=5 // pred_region
      %s95 = ssub.s32 %s8, 1
      // Predicated region
      $region13: #{tpu_custom_call.1} parent=11 // pred_check
        %p96 = pneg %p55
      $region14: #{tpu_custom_call.1} parent=11 // pred_check_branch
        %98 = sbr.rel (%p96) target = $region16
      $region15: #{tpu_custom_call.1} parent=11 // pred_region
        _
      $region16: #{tpu_custom_call.1} parent=11 // pred_fallthru
        _
    $region12: #{tpu_custom_call.1} parent=5 // pred_fallthru
      _
    %p99 = scmp.lt.s32.totalorder %s8, 4
    // Predicated region
    $region17: #{tpu_custom_call.1} parent=5 // pred_check
      %p100 = pneg %p99
    $region18: #{tpu_custom_call.1} parent=5 // pred_check_branch
      %102 = sbr.rel (%p100) target = $region20
    $region19: #{tpu_custom_call.1} parent=5 // pred_region
      // Predicated region
      $region21: #{tpu_custom_call.1} parent=19 // pred_check
        %p103 = pneg %p28
      $region22: #{tpu_custom_call.1} parent=19 // pred_check_branch
        %105 = sbr.rel (%p103) target = $region24
      $region23: #{tpu_custom_call.1} parent=19 // pred_region
        %s106 = smul.u32 16, %s8
        %p107 = scmp.lt.s32.totalorder %s106, 63
        %s108 = scalar_select %p107, %s106, 63
        %s109 = smul.addr %s108, 8
        %s110 = scalar_lea.vmem %s0, %s109
        %s111 = smul.u32 16, %s8
      $region24: #{tpu_custom_call.1} parent=19 // pred_fallthru
        _
    $region20: #{tpu_custom_call.1} parent=5 // pred_fallthru
      _
    %p112 = scmp.le.s32.totalorder 1, %s8
    %p113 = scmp.lt.s32.totalorder %s8, 5
    %p114 = pnand %p112, %p113
    %p115 = pneg %p114
    // Predicated region
    $region25: #{tpu_custom_call.1} parent=5 // pred_check
      _
    $region26: #{tpu_custom_call.1} parent=5 // pred_check_branch
      %117 = sbr.rel (%p114) target = $region28
    $region27: #{tpu_custom_call.1} parent=5 // pred_region
      %s118 = ssub.s32 %s8, 1
      %s119 = smul.u32 16, %s13
      %p120 = scmp.lt.s32.totalorder %s119, 63
      %s121 = scalar_select %p120, %s119, 63
      %s122 = smul.addr %s121, 8
      %s123 = scalar_lea.vmem %s0, %s122
      %p124 = pneg %p34
      %p125 = pneg %p31
      %p126 = pneg %p55
      %p127 = pneg %p52
      %p128 = pneg %p81
      %p129 = pneg %p78
      %s130 = smul.u32 16, %s13
      %p131 = scmp.lt.s32.totalorder %s130, 63
      %s132 = scalar_select %p131, %s130, 63
      %s133 = smul.addr %s132, 2
      %s134 = smul.addr %s133, 8
      %s135 = scalar_lea.vmem %s2, %s134
      %s136 = smul.u32 16, %s13
      %p137 = scmp.lt.s32.totalorder %s136, 63
      %s138 = scalar_select %p137, %s136, 63
      %s139 = smul.addr %s138, 8
      %s140 = scalar_lea.vmem %s0, %s139
      %s141 = smul.u32 16, %s13
      %s142 = smul.u32 16, %s13
      %p143 = scmp.lt.s32.totalorder %s142, 63
      %s144 = scalar_select %p143, %s142, 63
      %s145 = smul.addr %s144, 2
      %s146 = smul.addr %s145, 8
      %s147 = scalar_lea.vmem %s2, %s146
      %s148 = smul.u32 16, %s13
      %v149 = vld [vmem:[%s140] sm:$0xff]
      %v150 = vld [vmem:[%s140 + $0x8] sm:$0xff]
      %v151 = vld [vmem:[%s140 + $0x10] sm:$0xff]
      %v152 = vld [vmem:[%s140 + $0x18] sm:$0xff]
      %v153 = vld [vmem:[%s140 + $0x20] sm:$0xff]
      %v154 = vld [vmem:[%s140 + $0x28] sm:$0xff]
      %v155 = vld [vmem:[%s140 + $0x30] sm:$0xff]
      %v156 = vld [vmem:[%s140 + $0x38] sm:$0xff]
      %v157 = vld [vmem:[%s140 + $0x40] sm:$0xff]
      %v158 = vld [vmem:[%s140 + $0x48] sm:$0xff]
      %v159 = vld [vmem:[%s140 + $0x50] sm:$0xff]
      %v160 = vld [vmem:[%s140 + $0x58] sm:$0xff]
      %v161 = vld [vmem:[%s140 + $0x60] sm:$0xff]
      %v162 = vld [vmem:[%s140 + $0x68] sm:$0xff]
      %v163 = vld [vmem:[%s140 + $0x70] sm:$0xff]
      %v164 = vld [vmem:[%s140 + $0x78] sm:$0xff]
      %v165 = vld [vmem:[%s1] sm:$0xff]
      %v166 = vld [vmem:[%s1 + $0x8] sm:$0x3]
      %v167 = vmax.f32 %v149, 0.0
      %v168 = vmax.f32 %v150, 0.0
      %v169 = vmax.f32 %v151, 0.0
      %v170 = vmax.f32 %v152, 0.0
      %v171 = vmax.f32 %v153, 0.0
      %v172 = vmax.f32 %v154, 0.0
      %v173 = vmax.f32 %v155, 0.0
      %v174 = vmax.f32 %v156, 0.0
      %v175 = vmax.f32 %v157, 0.0
      %v176 = vmax.f32 %v158, 0.0
      %v177 = vmax.f32 %v159, 0.0
      %v178 = vmax.f32 %v160, 0.0
      %v179 = vmax.f32 %v161, 0.0
      %v180 = vmax.f32 %v162, 0.0
      %v181 = vmax.f32 %v163, 0.0
      %v182 = vmax.f32 %v164, 0.0
      %v183 = vmin.f32 %v167, 10.0
      %v184 = vmin.f32 %v168, 10.0
      %v185 = vmin.f32 %v169, 10.0
      %v186 = vmin.f32 %v170, 10.0
      %v187 = vmin.f32 %v171, 10.0
      %v188 = vmin.f32 %v172, 10.0
      %v189 = vmin.f32 %v173, 10.0
      %v190 = vmin.f32 %v174, 10.0
      %v191 = vmin.f32 %v175, 10.0
      %v192 = vmin.f32 %v176, 10.0
      %v193 = vmin.f32 %v177, 10.0
      %v194 = vmin.f32 %v178, 10.0
      %v195 = vmin.f32 %v179, 10.0
      %v196 = vmin.f32 %v180, 10.0
      %v197 = vmin.f32 %v181, 10.0
      %v198 = vmin.f32 %v182, 10.0
      %v199 = vmul.f32 %v183, 9.0
      %v200 = vmul.f32 %v184, 9.0
      %v201 = vmul.f32 %v185, 9.0
      %v202 = vmul.f32 %v186, 9.0
      %v203 = vmul.f32 %v187, 9.0
      %v204 = vmul.f32 %v188, 9.0
      %v205 = vmul.f32 %v189, 9.0
      %v206 = vmul.f32 %v190, 9.0
      %v207 = vmul.f32 %v191, 9.0
      %v208 = vmul.f32 %v192, 9.0
      %v209 = vmul.f32 %v193, 9.0
      %v210 = vmul.f32 %v194, 9.0
      %v211 = vmul.f32 %v195, 9.0
      %v212 = vmul.f32 %v196, 9.0
      %v213 = vmul.f32 %v197, 9.0
      %v214 = vmul.f32 %v198, 9.0
      %v215 = vrcp.pop 10.0
      %v216 = vmul.f32 %v199, %v215
      %v217 = vmul.f32 %v200, %v215
      %v218 = vmul.f32 %v201, %v215
      %v219 = vmul.f32 %v202, %v215
      %v220 = vmul.f32 %v203, %v215
      %v221 = vmul.f32 %v204, %v215
      %v222 = vmul.f32 %v205, %v215
      %v223 = vmul.f32 %v206, %v215
      %v224 = vmul.f32 %v207, %v215
      %v225 = vmul.f32 %v208, %v215
      %v226 = vmul.f32 %v209, %v215
      %v227 = vmul.f32 %v210, %v215
      %v228 = vmul.f32 %v211, %v215
      %v229 = vmul.f32 %v212, %v215
      %v230 = vmul.f32 %v213, %v215
      %v231 = vmul.f32 %v214, %v215
      %v232 = vfloor.f32 %v216
      %v233 = vfloor.f32 %v217
      %v234 = vfloor.f32 %v218
      %v235 = vfloor.f32 %v219
      %v236 = vfloor.f32 %v220
      %v237 = vfloor.f32 %v221
      %v238 = vfloor.f32 %v222
      %v239 = vfloor.f32 %v223
      %v240 = vfloor.f32 %v224
      %v241 = vfloor.f32 %v225
      %v242 = vfloor.f32 %v226
      %v243 = vfloor.f32 %v227
      %v244 = vfloor.f32 %v228
      %v245 = vfloor.f32 %v229
      %v246 = vfloor.f32 %v230
      %v247 = vfloor.f32 %v231
      %v248 = vmax.f32 %v232, 0.0
      %v249 = vmax.f32 %v233, 0.0
      %v250 = vmax.f32 %v234, 0.0
      %v251 = vmax.f32 %v235, 0.0
      %v252 = vmax.f32 %v236, 0.0
      %v253 = vmax.f32 %v237, 0.0
      %v254 = vmax.f32 %v238, 0.0
      %v255 = vmax.f32 %v239, 0.0
      %v256 = vmax.f32 %v240, 0.0
      %v257 = vmax.f32 %v241, 0.0
      %v258 = vmax.f32 %v242, 0.0
      %v259 = vmax.f32 %v243, 0.0
      %v260 = vmax.f32 %v244, 0.0
      %v261 = vmax.f32 %v245, 0.0
      %v262 = vmax.f32 %v246, 0.0
      %v263 = vmax.f32 %v247, 0.0
      %v264 = vmin.f32 %v248, 9.0
      %v265 = vmin.f32 %v249, 9.0
      %v266 = vmin.f32 %v250, 9.0
      %v267 = vmin.f32 %v251, 9.0
      %v268 = vmin.f32 %v252, 9.0
      %v269 = vmin.f32 %v253, 9.0
      %v270 = vmin.f32 %v254, 9.0
      %v271 = vmin.f32 %v255, 9.0
      %v272 = vmin.f32 %v256, 9.0
      %v273 = vmin.f32 %v257, 9.0
      %v274 = vmin.f32 %v258, 9.0
      %v275 = vmin.f32 %v259, 9.0
      %v276 = vmin.f32 %v260, 9.0
      %v277 = vmin.f32 %v261, 9.0
      %v278 = vmin.f32 %v262, 9.0
      %v279 = vmin.f32 %v263, 9.0
      %v280 = vceil.f32 %v216
      %v281 = vceil.f32 %v217
      %v282 = vceil.f32 %v218
      %v283 = vceil.f32 %v219
      %v284 = vceil.f32 %v220
      %v285 = vceil.f32 %v221
      %v286 = vceil.f32 %v222
      %v287 = vceil.f32 %v223
      %v288 = vceil.f32 %v224
      %v289 = vceil.f32 %v225
      %v290 = vceil.f32 %v226
      %v291 = vceil.f32 %v227
      %v292 = vceil.f32 %v228
      %v293 = vceil.f32 %v229
      %v294 = vceil.f32 %v230
      %v295 = vceil.f32 %v231
      %v296 = vmax.f32 %v280, 0.0
      %v297 = vmax.f32 %v281, 0.0
      %v298 = vmax.f32 %v282, 0.0
      %v299 = vmax.f32 %v283, 0.0
      %v300 = vmax.f32 %v284, 0.0
      %v301 = vmax.f32 %v285, 0.0
      %v302 = vmax.f32 %v286, 0.0
      %v303 = vmax.f32 %v287, 0.0
      %v304 = vmax.f32 %v288, 0.0
      %v305 = vmax.f32 %v289, 0.0
      %v306 = vmax.f32 %v290, 0.0
      %v307 = vmax.f32 %v291, 0.0
      %v308 = vmax.f32 %v292, 0.0
      %v309 = vmax.f32 %v293, 0.0
      %v310 = vmax.f32 %v294, 0.0
      %v311 = vmax.f32 %v295, 0.0
      %v312 = vmin.f32 %v296, 9.0
      %v313 = vmin.f32 %v297, 9.0
      %v314 = vmin.f32 %v298, 9.0
      %v315 = vmin.f32 %v299, 9.0
      %v316 = vmin.f32 %v300, 9.0
      %v317 = vmin.f32 %v301, 9.0
      %v318 = vmin.f32 %v302, 9.0
      %v319 = vmin.f32 %v303, 9.0
      %v320 = vmin.f32 %v304, 9.0
      %v321 = vmin.f32 %v305, 9.0
      %v322 = vmin.f32 %v306, 9.0
      %v323 = vmin.f32 %v307, 9.0
      %v324 = vmin.f32 %v308, 9.0
      %v325 = vmin.f32 %v309, 9.0
      %v326 = vmin.f32 %v310, 9.0
      %v327 = vmin.f32 %v311, 9.0
      %v328 = vsub.f32 %v216, %v264
      %v329 = vsub.f32 %v217, %v265
      %v330 = vsub.f32 %v218, %v266
      %v331 = vsub.f32 %v219, %v267
      %v332 = vsub.f32 %v220, %v268
      %v333 = vsub.f32 %v221, %v269
      %v334 = vsub.f32 %v222, %v270
      %v335 = vsub.f32 %v223, %v271
      %v336 = vsub.f32 %v224, %v272
      %v337 = vsub.f32 %v225, %v273
      %v338 = vsub.f32 %v226, %v274
      %v339 = vsub.f32 %v227, %v275
      %v340 = vsub.f32 %v228, %v276
      %v341 = vsub.f32 %v229, %v277
      %v342 = vsub.f32 %v230, %v278
      %v343 = vsub.f32 %v231, %v279
      %v344 = vcvt.f32.s32.to.zero.pseudo %v264
      %v345 = vcvt.f32.s32.to.zero.pseudo %v265
      %v346 = vcvt.f32.s32.to.zero.pseudo %v266
      %v347 = vcvt.f32.s32.to.zero.pseudo %v267
      %v348 = vcvt.f32.s32.to.zero.pseudo %v268
      %v349 = vcvt.f32.s32.to.zero.pseudo %v269
      %v350 = vcvt.f32.s32.to.zero.pseudo %v270
      %v351 = vcvt.f32.s32.to.zero.pseudo %v271
      %v352 = vcvt.f32.s32.to.zero.pseudo %v272
      %v353 = vcvt.f32.s32.to.zero.pseudo %v273
      %v354 = vcvt.f32.s32.to.zero.pseudo %v274
      %v355 = vcvt.f32.s32.to.zero.pseudo %v275
      %v356 = vcvt.f32.s32.to.zero.pseudo %v276
      %v357 = vcvt.f32.s32.to.zero.pseudo %v277
      %v358 = vcvt.f32.s32.to.zero.pseudo %v278
      %v359 = vcvt.f32.s32.to.zero.pseudo %v279
      %v360 = vcvt.f32.s32.to.zero.pseudo %v312
      %v361 = vcvt.f32.s32.to.zero.pseudo %v313
      %v362 = vcvt.f32.s32.to.zero.pseudo %v314
      %v363 = vcvt.f32.s32.to.zero.pseudo %v315
      %v364 = vcvt.f32.s32.to.zero.pseudo %v316
      %v365 = vcvt.f32.s32.to.zero.pseudo %v317
      %v366 = vcvt.f32.s32.to.zero.pseudo %v318
      %v367 = vcvt.f32.s32.to.zero.pseudo %v319
      %v368 = vcvt.f32.s32.to.zero.pseudo %v320
      %v369 = vcvt.f32.s32.to.zero.pseudo %v321
      %v370 = vcvt.f32.s32.to.zero.pseudo %v322
      %v371 = vcvt.f32.s32.to.zero.pseudo %v323
      %v372 = vcvt.f32.s32.to.zero.pseudo %v324
      %v373 = vcvt.f32.s32.to.zero.pseudo %v325
      %v374 = vcvt.f32.s32.to.zero.pseudo %v326
      %v375 = vcvt.f32.s32.to.zero.pseudo %v327
      %v376 = vlaneseq
      %v377 = vand.u32 %v376, 127
      %378 = vset.pattern.permute.xlu0 8
      %379 = vperm.xlu0 %378, %v344
      %v380 = vpop.permute.xlu0 %379
      %381 = vset.pattern.permute.xlu0 8
      %382 = vperm.xlu0 %381, %v345
      %v383 = vpop.permute.xlu0 %382
      %384 = vset.pattern.permute.xlu0 8
      %385 = vperm.xlu0 %384, %v346
      %v386 = vpop.permute.xlu0 %385
      %387 = vset.pattern.permute.xlu0 8
      %388 = vperm.xlu0 %387, %v347
      %v389 = vpop.permute.xlu0 %388
      %390 = vset.pattern.permute.xlu0 8
      %391 = vperm.xlu0 %390, %v348
      %v392 = vpop.permute.xlu0 %391
      %393 = vset.pattern.permute.xlu0 8
      %394 = vperm.xlu0 %393, %v349
      %v395 = vpop.permute.xlu0 %394
      %396 = vset.pattern.permute.xlu0 8
      %397 = vperm.xlu0 %396, %v350
      %v398 = vpop.permute.xlu0 %397
      %399 = vset.pattern.permute.xlu0 8
      %400 = vperm.xlu0 %399, %v351
      %v401 = vpop.permute.xlu0 %400
      %402 = vset.pattern.permute.xlu0 8
      %403 = vperm.xlu0 %402, %v352
      %v404 = vpop.permute.xlu0 %403
      %405 = vset.pattern.permute.xlu0 8
      %406 = vperm.xlu0 %405, %v353
      %v407 = vpop.permute.xlu0 %406
      %408 = vset.pattern.permute.xlu0 8
      %409 = vperm.xlu0 %408, %v354
      %v410 = vpop.permute.xlu0 %409
      %411 = vset.pattern.permute.xlu0 8
      %412 = vperm.xlu0 %411, %v355
      %v413 = vpop.permute.xlu0 %412
      %414 = vset.pattern.permute.xlu0 8
      %415 = vperm.xlu0 %414, %v356
      %v416 = vpop.permute.xlu0 %415
      %417 = vset.pattern.permute.xlu0 8
      %418 = vperm.xlu0 %417, %v357
      %v419 = vpop.permute.xlu0 %418
      %420 = vset.pattern.permute.xlu0 8
      %421 = vperm.xlu0 %420, %v358
      %v422 = vpop.permute.xlu0 %421
      %423 = vset.pattern.permute.xlu0 8
      %424 = vperm.xlu0 %423, %v359
      %v425 = vpop.permute.xlu0 %424
      %vm426 = vcmp.eq.s32.totalorder %v377, %v380
      %vm427 = vcmp.eq.s32.totalorder %v377, %v383
      %vm428 = vcmp.eq.s32.totalorder %v377, %v386
      %vm429 = vcmp.eq.s32.totalorder %v377, %v389
      %vm430 = vcmp.eq.s32.totalorder %v377, %v392
      %vm431 = vcmp.eq.s32.totalorder %v377, %v395
      %vm432 = vcmp.eq.s32.totalorder %v377, %v398
      %vm433 = vcmp.eq.s32.totalorder %v377, %v401
      %vm434 = vcmp.eq.s32.totalorder %v377, %v404
      %vm435 = vcmp.eq.s32.totalorder %v377, %v407
      %vm436 = vcmp.eq.s32.totalorder %v377, %v410
      %vm437 = vcmp.eq.s32.totalorder %v377, %v413
      %vm438 = vcmp.eq.s32.totalorder %v377, %v416
      %vm439 = vcmp.eq.s32.totalorder %v377, %v419
      %vm440 = vcmp.eq.s32.totalorder %v377, %v422
      %vm441 = vcmp.eq.s32.totalorder %v377, %v425
      %v442 = vsub.f32 1.0, %v328
      %v443 = vsub.f32 1.0, %v329
      %v444 = vsub.f32 1.0, %v330
      %v445 = vsub.f32 1.0, %v331
      %v446 = vsub.f32 1.0, %v332
      %v447 = vsub.f32 1.0, %v333
      %v448 = vsub.f32 1.0, %v334
      %v449 = vsub.f32 1.0, %v335
      %v450 = vsub.f32 1.0, %v336
      %v451 = vsub.f32 1.0, %v337
      %v452 = vsub.f32 1.0, %v338
      %v453 = vsub.f32 1.0, %v339
      %v454 = vsub.f32 1.0, %v340
      %v455 = vsub.f32 1.0, %v341
      %v456 = vsub.f32 1.0, %v342
      %v457 = vsub.f32 1.0, %v343
      %459 = vset.pattern.permute.xlu0 8
      %460 = vperm.xlu0 %459, %v442
      %v461 = vpop.permute.xlu0 %460
      %464 = vset.pattern.permute.xlu0 8
      %465 = vperm.xlu0 %464, %v443
      %v466 = vpop.permute.xlu0 %465
      %469 = vset.pattern.permute.xlu0 8
      %470 = vperm.xlu0 %469, %v444
      %v471 = vpop.permute.xlu0 %470
      %474 = vset.pattern.permute.xlu0 8
      %475 = vperm.xlu0 %474, %v445
      %v476 = vpop.permute.xlu0 %475
      %479 = vset.pattern.permute.xlu0 8
      %480 = vperm.xlu0 %479, %v446
      %v481 = vpop.permute.xlu0 %480
      %484 = vset.pattern.permute.xlu0 8
      %485 = vperm.xlu0 %484, %v447
      %v486 = vpop.permute.xlu0 %485
      %489 = vset.pattern.permute.xlu0 8
      %490 = vperm.xlu0 %489, %v448
      %v491 = vpop.permute.xlu0 %490
      %494 = vset.pattern.permute.xlu0 8
      %495 = vperm.xlu0 %494, %v449
      %v496 = vpop.permute.xlu0 %495
      %499 = vset.pattern.permute.xlu0 8
      %500 = vperm.xlu0 %499, %v450
      %v501 = vpop.permute.xlu0 %500
      %504 = vset.pattern.permute.xlu0 8
      %505 = vperm.xlu0 %504, %v451
      %v506 = vpop.permute.xlu0 %505
      %509 = vset.pattern.permute.xlu0 8
      %510 = vperm.xlu0 %509, %v452
      %v511 = vpop.permute.xlu0 %510
      %514 = vset.pattern.permute.xlu0 8
      %515 = vperm.xlu0 %514, %v453
      %v516 = vpop.permute.xlu0 %515
      %519 = vset.pattern.permute.xlu0 8
      %520 = vperm.xlu0 %519, %v454
      %v521 = vpop.permute.xlu0 %520
      %524 = vset.pattern.permute.xlu0 8
      %525 = vperm.xlu0 %524, %v455
      %v526 = vpop.permute.xlu0 %525
      %529 = vset.pattern.permute.xlu0 8
      %530 = vperm.xlu0 %529, %v456
      %v531 = vpop.permute.xlu0 %530
      %534 = vset.pattern.permute.xlu0 8
      %535 = vperm.xlu0 %534, %v457
      %v536 = vpop.permute.xlu0 %535
      %v538 = vsel %vm426, %v461, 0.0
      %v539 = vsel %vm427, %v466, 0.0
      %v540 = vsel %vm428, %v471, 0.0
      %v541 = vsel %vm429, %v476, 0.0
      %v542 = vsel %vm430, %v481, 0.0
      %v543 = vsel %vm431, %v486, 0.0
      %v544 = vsel %vm432, %v491, 0.0
      %v545 = vsel %vm433, %v496, 0.0
      %v546 = vsel %vm434, %v501, 0.0
      %v547 = vsel %vm435, %v506, 0.0
      %v548 = vsel %vm436, %v511, 0.0
      %v549 = vsel %vm437, %v516, 0.0
      %v550 = vsel %vm438, %v521, 0.0
      %v551 = vsel %vm439, %v526, 0.0
      %v552 = vsel %vm440, %v531, 0.0
      %v553 = vsel %vm441, %v536, 0.0
      %554 = vset.pattern.permute.xlu0 8
      %555 = vperm.xlu0 %554, %v360
      %v556 = vpop.permute.xlu0 %555
      %557 = vset.pattern.permute.xlu0 8
      %558 = vperm.xlu0 %557, %v361
      %v559 = vpop.permute.xlu0 %558
      %560 = vset.pattern.permute.xlu0 8
      %561 = vperm.xlu0 %560, %v362
      %v562 = vpop.permute.xlu0 %561
      %563 = vset.pattern.permute.xlu0 8
      %564 = vperm.xlu0 %563, %v363
      %v565 = vpop.permute.xlu0 %564
      %566 = vset.pattern.permute.xlu0 8
      %567 = vperm.xlu0 %566, %v364
      %v568 = vpop.permute.xlu0 %567
      %569 = vset.pattern.permute.xlu0 8
      %570 = vperm.xlu0 %569, %v365
      %v571 = vpop.permute.xlu0 %570
      %572 = vset.pattern.permute.xlu0 8
      %573 = vperm.xlu0 %572, %v366
      %v574 = vpop.permute.xlu0 %573
      %575 = vset.pattern.permute.xlu0 8
      %576 = vperm.xlu0 %575, %v367
      %v577 = vpop.permute.xlu0 %576
      %578 = vset.pattern.permute.xlu0 8
      %579 = vperm.xlu0 %578, %v368
      %v580 = vpop.permute.xlu0 %579
      %581 = vset.pattern.permute.xlu0 8
      %582 = vperm.xlu0 %581, %v369
      %v583 = vpop.permute.xlu0 %582
      %584 = vset.pattern.permute.xlu0 8
      %585 = vperm.xlu0 %584, %v370
      %v586 = vpop.permute.xlu0 %585
      %587 = vset.pattern.permute.xlu0 8
      %588 = vperm.xlu0 %587, %v371
      %v589 = vpop.permute.xlu0 %588
      %590 = vset.pattern.permute.xlu0 8
      %591 = vperm.xlu0 %590, %v372
      %v592 = vpop.permute.xlu0 %591
      %593 = vset.pattern.permute.xlu0 8
      %594 = vperm.xlu0 %593, %v373
      %v595 = vpop.permute.xlu0 %594
      %596 = vset.pattern.permute.xlu0 8
      %597 = vperm.xlu0 %596, %v374
      %v598 = vpop.permute.xlu0 %597
      %599 = vset.pattern.permute.xlu0 8
      %600 = vperm.xlu0 %599, %v375
      %v601 = vpop.permute.xlu0 %600
      %vm602 = vcmp.eq.s32.totalorder %v377, %v556
      %vm603 = vcmp.eq.s32.totalorder %v377, %v559
      %vm604 = vcmp.eq.s32.totalorder %v377, %v562
      %vm605 = vcmp.eq.s32.totalorder %v377, %v565
      %vm606 = vcmp.eq.s32.totalorder %v377, %v568
      %vm607 = vcmp.eq.s32.totalorder %v377, %v571
      %vm608 = vcmp.eq.s32.totalorder %v377, %v574
      %vm609 = vcmp.eq.s32.totalorder %v377, %v577
      %vm610 = vcmp.eq.s32.totalorder %v377, %v580
      %vm611 = vcmp.eq.s32.totalorder %v377, %v583
      %vm612 = vcmp.eq.s32.totalorder %v377, %v586
      %vm613 = vcmp.eq.s32.totalorder %v377, %v589
      %vm614 = vcmp.eq.s32.totalorder %v377, %v592
      %vm615 = vcmp.eq.s32.totalorder %v377, %v595
      %vm616 = vcmp.eq.s32.totalorder %v377, %v598
      %vm617 = vcmp.eq.s32.totalorder %v377, %v601
      %619 = vset.pattern.permute.xlu0 8
      %620 = vperm.xlu0 %619, %v264
      %v621 = vpop.permute.xlu0 %620
      %624 = vset.pattern.permute.xlu0 8
      %625 = vperm.xlu0 %624, %v265
      %v626 = vpop.permute.xlu0 %625
      %629 = vset.pattern.permute.xlu0 8
      %630 = vperm.xlu0 %629, %v266
      %v631 = vpop.permute.xlu0 %630
      %634 = vset.pattern.permute.xlu0 8
      %635 = vperm.xlu0 %634, %v267
      %v636 = vpop.permute.xlu0 %635
      %639 = vset.pattern.permute.xlu0 8
      %640 = vperm.xlu0 %639, %v268
      %v641 = vpop.permute.xlu0 %640
      %644 = vset.pattern.permute.xlu0 8
      %645 = vperm.xlu0 %644, %v269
      %v646 = vpop.permute.xlu0 %645
      %649 = vset.pattern.permute.xlu0 8
      %650 = vperm.xlu0 %649, %v270
      %v651 = vpop.permute.xlu0 %650
      %654 = vset.pattern.permute.xlu0 8
      %655 = vperm.xlu0 %654, %v271
      %v656 = vpop.permute.xlu0 %655
      %659 = vset.pattern.permute.xlu0 8
      %660 = vperm.xlu0 %659, %v272
      %v661 = vpop.permute.xlu0 %660
      %664 = vset.pattern.permute.xlu0 8
      %665 = vperm.xlu0 %664, %v273
      %v666 = vpop.permute.xlu0 %665
      %669 = vset.pattern.permute.xlu0 8
      %670 = vperm.xlu0 %669, %v274
      %v671 = vpop.permute.xlu0 %670
      %674 = vset.pattern.permute.xlu0 8
      %675 = vperm.xlu0 %674, %v275
      %v676 = vpop.permute.xlu0 %675
      %679 = vset.pattern.permute.xlu0 8
      %680 = vperm.xlu0 %679, %v276
      %v681 = vpop.permute.xlu0 %680
      %684 = vset.pattern.permute.xlu0 8
      %685 = vperm.xlu0 %684, %v277
      %v686 = vpop.permute.xlu0 %685
      %689 = vset.pattern.permute.xlu0 8
      %690 = vperm.xlu0 %689, %v278
      %v691 = vpop.permute.xlu0 %690
      %694 = vset.pattern.permute.xlu0 8
      %695 = vperm.xlu0 %694, %v279
      %v696 = vpop.permute.xlu0 %695
      %v698 = vsel %vm602, %v621, 0.0
      %v699 = vsel %vm603, %v626, 0.0
      %v700 = vsel %vm604, %v631, 0.0
      %v701 = vsel %vm605, %v636, 0.0
      %v702 = vsel %vm606, %v641, 0.0
      %v703 = vsel %vm607, %v646, 0.0
      %v704 = vsel %vm608, %v651, 0.0
      %v705 = vsel %vm609, %v656, 0.0
      %v706 = vsel %vm610, %v661, 0.0
      %v707 = vsel %vm611, %v666, 0.0
      %v708 = vsel %vm612, %v671, 0.0
      %v709 = vsel %vm613, %v676, 0.0
      %v710 = vsel %vm614, %v681, 0.0
      %v711 = vsel %vm615, %v686, 0.0
      %v712 = vsel %vm616, %v691, 0.0
      %v713 = vsel %vm617, %v696, 0.0
      %v714 = vadd.f32 %v538, %v698
      %v715 = vadd.f32 %v539, %v699
      %v716 = vadd.f32 %v540, %v700
      %v717 = vadd.f32 %v541, %v701
      %v718 = vadd.f32 %v542, %v702
      %v719 = vadd.f32 %v543, %v703
      %v720 = vadd.f32 %v544, %v704
      %v721 = vadd.f32 %v545, %v705
      %v722 = vadd.f32 %v546, %v706
      %v723 = vadd.f32 %v547, %v707
      %v724 = vadd.f32 %v548, %v708
      %v725 = vadd.f32 %v549, %v709
      %v726 = vadd.f32 %v550, %v710
      %v727 = vadd.f32 %v551, %v711
      %v728 = vadd.f32 %v552, %v712
      %v729 = vadd.f32 %v553, %v713
      %vm730 = vcmask 80896
      %v732 = vsel %vm730, %v714, 0
      %v735 = vsel %vm730, %v715, 0
      %v738 = vsel %vm730, %v716, 0
      %v741 = vsel %vm730, %v717, 0
      %v744 = vsel %vm730, %v718, 0
      %v747 = vsel %vm730, %v719, 0
      %v750 = vsel %vm730, %v720, 0
      %v753 = vsel %vm730, %v721, 0
      %v756 = vsel %vm730, %v722, 0
      %v759 = vsel %vm730, %v723, 0
      %v762 = vsel %vm730, %v724, 0
      %v765 = vsel %vm730, %v725, 0
      %v768 = vsel %vm730, %v726, 0
      %v771 = vsel %vm730, %v727, 0
      %v774 = vsel %vm730, %v728, 0
      %v777 = vsel %vm730, %v729, 0
      %vm779 = vcmask 1041408
      %v781 = vsel %vm779, %v166, 0
      %783 = vmatprep.subr.mxu0 0.0
      %784 = vmatpush1.msra.mxu0 %v165
      %785 = vmatprep.subr.mxu0 0.0
      %786 = vmatpush1.msra.mxu0 %v781
      %787 = vmatprep.subr.mxu0 0.0
      %788 = vmatpush1.msra.mxu0 0.0
      %789 = vmatprep.subr.mxu0 0.0
      %790 = vmatpush1.msra.mxu0 0.0
      %791 = vmatprep.subr.mxu0 0.0
      %792 = vmatpush1.msra.mxu0 0.0
      %793 = vmatprep.subr.mxu0 0.0
      %794 = vmatpush1.msra.mxu0 0.0
      %795 = vmatprep.subr.mxu0 0.0
      %796 = vmatpush1.msra.mxu0 0.0
      %797 = vmatprep.subr.mxu0 0.0
      %798 = vmatpush1.msra.mxu0 0.0
      %799 = vmatprep.subr.mxu0 0.0
      %800 = vmatpush1.msra.mxu0 0.0
      %801 = vmatprep.subr.mxu0 0.0
      %802 = vmatpush1.msra.mxu0 0.0
      %803 = vmatprep.subr.mxu0 0.0
      %804 = vmatpush1.msra.mxu0 0.0
      %805 = vmatprep.subr.mxu0 0.0
      %806 = vmatpush1.msra.mxu0 0.0
      %807 = vmatprep.subr.mxu0 0.0
      %808 = vmatpush1.msra.mxu0 0.0
      %809 = vmatprep.subr.mxu0 0.0
      %810 = vmatpush1.msra.mxu0 0.0
      %811 = vmatprep.subr.mxu0 0.0
      %812 = vmatpush1.msra.mxu0 0.0
      %813 = vmatprep.subr.mxu0 0.0
      %814 = vmatpush1.msra.mxu0 0.0
      %815 = vmatprep.subr.mxu0 0.0
      %816 = vmatpush1.msra.mxu0 0.0
      %817 = vmatprep.subr.mxu0 0.0
      %818 = vmatpush1.msra.mxu0 0.0
      %819 = vmatprep.subr.mxu0 0.0
      %820 = vmatpush1.msra.mxu0 0.0
      %821 = vmatprep.subr.mxu0 0.0
      %822 = vmatpush1.msra.mxu0 0.0
      %823 = vmatprep.subr.mxu0 0.0
      %824 = vmatpush1.msra.mxu0 0.0
      %825 = vmatprep.subr.mxu0 0.0
      %826 = vmatpush1.msra.mxu0 0.0
      %827 = vmatprep.subr.mxu0 0.0
      %828 = vmatpush1.msra.mxu0 0.0
      %829 = vmatprep.subr.mxu0 0.0
      %830 = vmatpush1.msra.mxu0 0.0
      %831 = vmatprep.subr.mxu0 0.0
      %832 = vmatpush1.msra.mxu0 0.0
      %833 = vmatprep.subr.mxu0 0.0
      %834 = vmatpush1.msra.mxu0 0.0
      %835 = vmatprep.subr.mxu0 0.0
      %836 = vmatpush1.msra.mxu0 0.0
      %837 = vmatprep.subr.mxu0 0.0
      %838 = vmatpush1.msra.mxu0 0.0
      %839 = vmatprep.subr.mxu0 0.0
      %840 = vmatpush1.msra.mxu0 0.0
      %841 = vmatprep.subr.mxu0 0.0
      %842 = vmatpush1.msra.mxu0 0.0
      %843 = vmatprep.subr.mxu0 0.0
      %844 = vmatpush1.msra.mxu0 0.0
      %845 = vmatprep.subr.mxu0 0.0
      %846 = vmatpush1.msra.mxu0 0.0
      %847 = vmatprep.mubr.f32.mxu0 0.0
      %848 = vmatmul.mubr.f32.gmra.mrb[0].mxu0 %v732
      %v849 = vpop.f32.mrb[0].mxu0
      %v850 = vadd.f32 0.0, %v849
      %v851 = vpop.f32.mrb[0].mxu0
      %852 = vmatprep.mubr.f32.mxu0 0.0
      %853 = vmatmul.mubr.f32.gmra.mrb[0].mxu0 %v735
      %v854 = vpop.f32.mrb[0].mxu0
      %v855 = vadd.f32 0.0, %v854
      %v856 = vpop.f32.mrb[0].mxu0
      %857 = vmatprep.mubr.f32.mxu0 0.0
      %858 = vmatmul.mubr.f32.gmra.mrb[0].mxu0 %v738
      %v859 = vpop.f32.mrb[0].mxu0
      %v860 = vadd.f32 0.0, %v859
      %v861 = vpop.f32.mrb[0].mxu0
      %862 = vmatprep.mubr.f32.mxu0 0.0
      %863 = vmatmul.mubr.f32.gmra.mrb[0].mxu0 %v741
      %v864 = vpop.f32.mrb[0].mxu0
      %v865 = vadd.f32 0.0, %v864
      %v866 = vpop.f32.mrb[0].mxu0
      %867 = vmatprep.mubr.f32.mxu0 0.0
      %868 = vmatmul.mubr.f32.gmra.mrb[0].mxu0 %v744
      %v869 = vpop.f32.mrb[0].mxu0
      %v870 = vadd.f32 0.0, %v869
      %v871 = vpop.f32.mrb[0].mxu0
      %872 = vmatprep.mubr.f32.mxu0 0.0
      %873 = vmatmul.mubr.f32.gmra.mrb[0].mxu0 %v747
      %v874 = vpop.f32.mrb[0].mxu0
      %v875 = vadd.f32 0.0, %v874
      %v876 = vpop.f32.mrb[0].mxu0
      %877 = vmatprep.mubr.f32.mxu0 0.0
      %878 = vmatmul.mubr.f32.gmra.mrb[0].mxu0 %v750
      %v879 = vpop.f32.mrb[0].mxu0
      %v880 = vadd.f32 0.0, %v879
      %v881 = vpop.f32.mrb[0].mxu0
      %882 = vmatprep.mubr.f32.mxu0 0.0
      %883 = vmatmul.mubr.f32.gmra.mrb[0].mxu0 %v753
      %v884 = vpop.f32.mrb[0].mxu0
      %v885 = vadd.f32 0.0, %v884
      %v886 = vpop.f32.mrb[0].mxu0
      %887 = vmatprep.mubr.f32.mxu0 0.0
      %888 = vmatmul.mubr.f32.gmra.mrb[0].mxu0 %v756
      %v889 = vpop.f32.mrb[0].mxu0
      %v890 = vadd.f32 0.0, %v889
      %v891 = vpop.f32.mrb[0].mxu0
      %892 = vmatprep.mubr.f32.mxu0 0.0
      %893 = vmatmul.mubr.f32.gmra.mrb[0].mxu0 %v759
      %v894 = vpop.f32.mrb[0].mxu0
      %v895 = vadd.f32 0.0, %v894
      %v896 = vpop.f32.mrb[0].mxu0
      %897 = vmatprep.mubr.f32.mxu0 0.0
      %898 = vmatmul.mubr.f32.gmra.mrb[0].mxu0 %v762
      %v899 = vpop.f32.mrb[0].mxu0
      %v900 = vadd.f32 0.0, %v899
      %v901 = vpop.f32.mrb[0].mxu0
      %902 = vmatprep.mubr.f32.mxu0 0.0
      %903 = vmatmul.mubr.f32.gmra.mrb[0].mxu0 %v765
      %v904 = vpop.f32.mrb[0].mxu0
      %v905 = vadd.f32 0.0, %v904
      %v906 = vpop.f32.mrb[0].mxu0
      %907 = vmatprep.mubr.f32.mxu0 0.0
      %908 = vmatmul.mubr.f32.gmra.mrb[0].mxu0 %v768
      %v909 = vpop.f32.mrb[0].mxu0
      %v910 = vadd.f32 0.0, %v909
      %v911 = vpop.f32.mrb[0].mxu0
      %912 = vmatprep.mubr.f32.mxu0 0.0
      %913 = vmatmul.mubr.f32.gmra.mrb[0].mxu0 %v771
      %v914 = vpop.f32.mrb[0].mxu0
      %v915 = vadd.f32 0.0, %v914
      %v916 = vpop.f32.mrb[0].mxu0
      %917 = vmatprep.mubr.f32.mxu0 0.0
      %918 = vmatmul.mubr.f32.gmra.mrb[0].mxu0 %v774
      %v919 = vpop.f32.mrb[0].mxu0
      %v920 = vadd.f32 0.0, %v919
      %v921 = vpop.f32.mrb[0].mxu0
      %922 = vmatprep.mubr.f32.mxu0 0.0
      %923 = vmatmul.mubr.f32.gmra.mrb[0].mxu0 %v777
      %v924 = vpop.f32.mrb[0].mxu0
      %v925 = vadd.f32 0.0, %v924
      %v926 = vpop.f32.mrb[0].mxu0
      %927 = vdwg.mxu0
      %944 = vrot.lane.b32.xlu0 %v850, 8
      %v945 = vpop.permute.xlu0 %944
      %946 = vrot.lane.b32.xlu0 %v855, 8
      %v947 = vpop.permute.xlu0 %946
      %948 = vrot.lane.b32.xlu0 %v860, 8
      %v949 = vpop.permute.xlu0 %948
      %950 = vrot.lane.b32.xlu0 %v865, 8
      %v951 = vpop.permute.xlu0 %950
      %952 = vrot.lane.b32.xlu0 %v870, 8
      %v953 = vpop.permute.xlu0 %952
      %954 = vrot.lane.b32.xlu0 %v875, 8
      %v955 = vpop.permute.xlu0 %954
      %956 = vrot.lane.b32.xlu0 %v880, 8
      %v957 = vpop.permute.xlu0 %956
      %958 = vrot.lane.b32.xlu0 %v885, 8
      %v959 = vpop.permute.xlu0 %958
      %960 = vrot.lane.b32.xlu0 %v890, 8
      %v961 = vpop.permute.xlu0 %960
      %962 = vrot.lane.b32.xlu0 %v895, 8
      %v963 = vpop.permute.xlu0 %962
      %964 = vrot.lane.b32.xlu0 %v900, 8
      %v965 = vpop.permute.xlu0 %964
      %966 = vrot.lane.b32.xlu0 %v905, 8
      %v967 = vpop.permute.xlu0 %966
      %968 = vrot.lane.b32.xlu0 %v910, 8
      %v969 = vpop.permute.xlu0 %968
      %970 = vrot.lane.b32.xlu0 %v915, 8
      %v971 = vpop.permute.xlu0 %970
      %972 = vrot.lane.b32.xlu0 %v920, 8
      %v973 = vpop.permute.xlu0 %972
      %974 = vrot.lane.b32.xlu0 %v925, 8
      %v975 = vpop.permute.xlu0 %974
      %vm992 = vcmask 64512
      %v993 = vsel %vm992, %v149, %v945
      %v994 = vsel %vm992, %v150, %v947
      %v995 = vsel %vm992, %v151, %v949
      %v996 = vsel %vm992, %v152, %v951
      %v997 = vsel %vm992, %v153, %v953
      %v998 = vsel %vm992, %v154, %v955
      %v999 = vsel %vm992, %v155, %v957
      %v1000 = vsel %vm992, %v156, %v959
      %v1001 = vsel %vm992, %v157, %v961
      %v1002 = vsel %vm992, %v158, %v963
      %v1003 = vsel %vm992, %v159, %v965
      %v1004 = vsel %vm992, %v160, %v967
      %v1005 = vsel %vm992, %v161, %v969
      %v1006 = vsel %vm992, %v162, %v971
      %v1007 = vsel %vm992, %v163, %v973
      %v1008 = vsel %vm992, %v164, %v975
      %1009 = vst [vmem:[%s147] sm:$0xff] %v993
      %1010 = vst.msk [vmem:[%s147 + $0x8] sm:$0xff] %vm992, %v945
      %1011 = vst [vmem:[%s147 + $0x10] sm:$0xff] %v994
      %1012 = vst.msk [vmem:[%s147 + $0x18] sm:$0xff] %vm992, %v947
      %1013 = vst [vmem:[%s147 + $0x20] sm:$0xff] %v995
      %1014 = vst.msk [vmem:[%s147 + $0x28] sm:$0xff] %vm992, %v949
      %1015 = vst [vmem:[%s147 + $0x30] sm:$0xff] %v996
      %1016 = vst.msk [vmem:[%s147 + $0x38] sm:$0xff] %vm992, %v951
      %1017 = vst [vmem:[%s147 + $0x40] sm:$0xff] %v997
      %1018 = vst.msk [vmem:[%s147 + $0x48] sm:$0xff] %vm992, %v953
      %1019 = vst [vmem:[%s147 + $0x50] sm:$0xff] %v998
      %1020 = vst.msk [vmem:[%s147 + $0x58] sm:$0xff] %vm992, %v955
      %1021 = vst [vmem:[%s147 + $0x60] sm:$0xff] %v999
      %1022 = vst.msk [vmem:[%s147 + $0x68] sm:$0xff] %vm992, %v957
      %1023 = vst [vmem:[%s147 + $0x70] sm:$0xff] %v1000
      %1024 = vst.msk [vmem:[%s147 + $0x78] sm:$0xff] %vm992, %v959
      %1025 = vst [vmem:[%s147 + $0x80] sm:$0xff] %v1001
      %1026 = vst.msk [vmem:[%s147 + $0x88] sm:$0xff] %vm992, %v961
      %1027 = vst [vmem:[%s147 + $0x90] sm:$0xff] %v1002
      %1028 = vst.msk [vmem:[%s147 + $0x98] sm:$0xff] %vm992, %v963
      %1029 = vst [vmem:[%s147 + $0xa0] sm:$0xff] %v1003
      %1030 = vst.msk [vmem:[%s147 + $0xa8] sm:$0xff] %vm992, %v965
      %1031 = vst [vmem:[%s147 + $0xb0] sm:$0xff] %v1004
      %1032 = vst.msk [vmem:[%s147 + $0xb8] sm:$0xff] %vm992, %v967
      %1033 = vst [vmem:[%s147 + $0xc0] sm:$0xff] %v1005
      %1034 = vst.msk [vmem:[%s147 + $0xc8] sm:$0xff] %vm992, %v969
      %1035 = vst [vmem:[%s147 + $0xd0] sm:$0xff] %v1006
      %1036 = vst.msk [vmem:[%s147 + $0xd8] sm:$0xff] %vm992, %v971
      %1037 = vst [vmem:[%s147 + $0xe0] sm:$0xff] %v1007
      %1038 = vst.msk [vmem:[%s147 + $0xe8] sm:$0xff] %vm992, %v973
      %1039 = vst [vmem:[%s147 + $0xf0] sm:$0xff] %v1008
      %1040 = vst.msk [vmem:[%s147 + $0xf8] sm:$0xff] %vm992, %v975
      %s1041 = smul.u32 16, %s13
      %p1042 = scmp.lt.s32.totalorder %s1041, 63
      %s1043 = scalar_select %p1042, %s1041, 63
      %s1044 = smul.addr %s1043, 2
      %s1045 = smul.addr %s1044, 8
      %s1046 = scalar_lea.vmem %s2, %s1045
      // Predicated region
      $region29: #{tpu_custom_call.1} parent=27 // pred_check
        %p1047 = pneg %p78
      $region30: #{tpu_custom_call.1} parent=27 // pred_check_branch
        %1049 = sbr.rel (%p1047) target = $region32
      $region31: #{tpu_custom_call.1} parent=27 // pred_region
        %s1050 = smul.u32 16, %s13
      $region32: #{tpu_custom_call.1} parent=27 // pred_fallthru
        _
    $region28: #{tpu_custom_call.1} parent=5 // pred_fallthru
      _
    %p1051 = scmp.le.s32.totalorder 2, %s8
    // Predicated region
    $region33: #{tpu_custom_call.1} parent=5 // pred_check
      %p1052 = pneg %p1051
    $region34: #{tpu_custom_call.1} parent=5 // pred_check_branch
      %1054 = sbr.rel (%p1052) target = $region36
    $region35: #{tpu_custom_call.1} parent=5 // pred_region
      %s1055 = ssub.s32 %s8, 2
      // Predicated region
      $region37: #{tpu_custom_call.1} parent=35 // pred_check
        %p1056 = pneg %p84
      $region38: #{tpu_custom_call.1} parent=35 // pred_check_branch
        %1058 = sbr.rel (%p1056) target = $region40
      $region39: #{tpu_custom_call.1} parent=35 // pred_region
        %s1059 = smul.u32 16, %s14
        %p1060 = scmp.lt.s32.totalorder %s1059, 63
        %s1061 = scalar_select %p1060, %s1059, 63
        %s1062 = smul.addr %s1061, 2
        %s1063 = smul.addr %s1062, 8
        %s1064 = scalar_lea.vmem %s2, %s1063
      $region40: #{tpu_custom_call.1} parent=35 // pred_fallthru
        _
    $region36: #{tpu_custom_call.1} parent=5 // pred_fallthru
      _
  $region6: #{tpu_custom_call.1} parent=0 // loop_footer
    %s12 = sadd.s32 1, %s8
  $region7: #{tpu_custom_call.1} parent=0 // loop_footer_branch
    %7 = sbr.rel target = $region3
  $region8: #{tpu_custom_call.1} parent=0 // loop_exit
    _

</llo_original>
